<compile_context>
chip_gen: v5e
topology: v5e:2x2
jax: 0.10.0
libtpu: 0.0.40
codegen_flags: <defaults>
</compile_context>

<pallas_src>
import math
import numpy as np
import jax
import jax.numpy as jnp
from jax.experimental import pallas as pl
from jax.experimental.pallas import tpu as pltpu


POOLED = 7                    # ROIAlign output resolution (7x7)
NUM_BINS = POOLED * POOLED    # 49
BINS_PAD = 56                 # 49 padded to a multiple of 8 sublanes (pad rows repeat bin 0)
LANE = 128                    # class-lane padding target


# ----------------------------------------------------------------------------
# Host-side glue: ROIAlign bilinear weights (torchvision semantics, aligned=True,
# sampling_ratio=0).  Data-dependent sample counts -> computed with numpy.
# ----------------------------------------------------------------------------
def roi_align_weights(bboxes, spatial_scale, H, W, pooled=POOLED, sampling_ratio=0, aligned=True):
    M = bboxes.shape[0]
    Wmat = np.zeros((M, pooled * pooled, H * W), dtype=np.float32)
    offset = 0.5 if aligned else 0.0
    for m in range(M):
        _, x1, y1, x2, y2 = bboxes[m]
        roi_start_w = x1 * spatial_scale - offset
        roi_start_h = y1 * spatial_scale - offset
        roi_end_w = x2 * spatial_scale - offset
        roi_end_h = y2 * spatial_scale - offset
        roi_w = roi_end_w - roi_start_w
        roi_h = roi_end_h - roi_start_h
        if not aligned:
            roi_w = max(roi_w, 1.0)
            roi_h = max(roi_h, 1.0)
        bin_h = roi_h / pooled
        bin_w = roi_w / pooled
        grid_h = sampling_ratio if sampling_ratio > 0 else int(math.ceil(roi_h / pooled))
        grid_w = sampling_ratio if sampling_ratio > 0 else int(math.ceil(roi_w / pooled))
        count = max(grid_h * grid_w, 1)
        for ph in range(pooled):
            for pw in range(pooled):
                b = ph * pooled + pw
                for iy in range(grid_h):
                    y = roi_start_h + ph * bin_h + (iy + 0.5) * bin_h / grid_h
                    for ix in range(grid_w):
                        x = roi_start_w + pw * bin_w + (ix + 0.5) * bin_w / grid_w
                        if y < -1.0 or y > H or x < -1.0 or x > W:
                            continue
                        yy = max(y, 0.0)
                        xx = max(x, 0.0)
                        y_low = int(yy)
                        x_low = int(xx)
                        if y_low >= H - 1:
                            y_high = y_low = H - 1
                            yy = float(y_low)
                        else:
                            y_high = y_low + 1
                        if x_low >= W - 1:
                            x_high = x_low = W - 1
                            xx = float(x_low)
                        else:
                            x_high = x_low + 1
                        ly = yy - y_low
                        lx = xx - x_low
                        hy = 1.0 - ly
                        hx = 1.0 - lx
                        Wmat[m, b, y_low * W + x_low] += hy * hx / count
                        Wmat[m, b, y_low * W + x_high] += hy * lx / count
                        Wmat[m, b, y_high * W + x_low] += ly * hx / count
                        Wmat[m, b, y_high * W + x_high] += ly * lx / count
    return Wmat


def build_roi_weight_rows(bboxes, spatial_scale, H, W, num_images, roi_tile=8):
    """Dense (M_pad*BINS_PAD, num_images*H*W) ROIAlign weight matrix.

    * bins padded 49->56 by repeating bin 0 (max-pool invariant, sublane-aligned),
    * each ROI's (56, H*W) block lands at column offset batch_idx*H*W, folding the
      ROI->image gather into one matmul against the stacked per-image means,
    * ROI count padded to a multiple of roi_tile with zero rows (sliced off later).
    Returns (rows_2d, w49) where w49 is the raw (M, 49, H*W) weights (for reference).
    """
    w49 = roi_align_weights(bboxes, spatial_scale, H, W, pooled=POOLED)
    M, _, HW = w49.shape
    pad = np.repeat(w49[:, :1, :], BINS_PAD - NUM_BINS, axis=1)
    w56 = np.concatenate([w49, pad], axis=1)                               # (M, 56, HW)
    M_pad = ((M + roi_tile - 1) // roi_tile) * roi_tile
    rows = np.zeros((M_pad, BINS_PAD, num_images * HW), dtype=np.float32)
    for m in range(M):
        b = int(bboxes[m, 0])
        rows[m, :, b * HW:(b + 1) * HW] = w56[m]
    return rows.reshape(M_pad * BINS_PAD, num_images * HW), w49


def pad_projection(pw, pb, lane=LANE):
    """rt_projection packed for lane-dense stores: weights pre-transposed to
    (C_tot, K_pad) with zero-padded classes; bias padded with -1e30 so the softmax
    denominator ignores the padding."""
    K, C = pw.shape
    K_pad = ((K + lane - 1) // lane) * lane
    pw_t = np.zeros((C, K_pad), dtype=np.float32)
    pw_t[:, :K] = np.asarray(pw, dtype=np.float32).T
    pb_p = np.full((1, K_pad), -1e30, dtype=np.float32)
    pb_p[0, :K] = np.asarray(pb, dtype=np.float32).reshape(-1)
    return jnp.asarray(pw_t), jnp.asarray(pb_p)


# ----------------------------------------------------------------------------
# Pallas kernel: one grid step per chunk of `roi_tile` ROIs (all pathways fused).
# ----------------------------------------------------------------------------
def head_kernel(mean_ref,    # (N*HW, C_s+C_f)  per-image temporal means (resident)
                w_ref,       # (roi_tile*56, N*HW) ROIAlign weights for this ROI chunk
                pw_ref,      # (C_s+C_f, K_pad) projection weights (pre-transposed)
                pb_ref,      # (1, K_pad)       projection bias (-1e30 in padded lanes)
                out_ref):    # (roi_tile, K_pad) softmax probabilities
    roi_tile = out_ref.shape[0]
    bins_pad = w_ref.shape[0] // roi_tile

    # ROIAlign (+ ROI->image gather baked into the weight columns): one MXU matmul.
    bins = jnp.dot(w_ref[...], mean_ref[...],
                   preferred_element_type=jnp.float32)            # (roi_tile*56, C_tot)

    # MaxPool2d(7,7): max over each ROI's 56 (= 49 real + 7 repeated) bins.
    bins3 = bins.reshape(roi_tile, bins_pad, bins.shape[-1])
    pooled = jnp.max(bins3, axis=1)                               # (roi_tile, C_tot)

    # Linear on concat([slow, fast]) (pathways already fused along channels).
    logits = jnp.dot(pooled, pw_ref[...],
                     preferred_element_type=jnp.float32) + pb_ref[...]   # (roi_tile, K_pad)

    # Softmax(dim=-1); padded class lanes carry -1e30 logits -> exp == 0.
    mx = jnp.max(logits, axis=-1, keepdims=True)
    ex = jnp.exp(logits - mx)
    out_ref[...] = ex / jnp.sum(ex, axis=-1, keepdims=True)


def head_forward(feats_slow, feats_fast, w_roi_rows, pw_t_pad, pb_pad,
                 num_rois, num_classes, *, roi_tile=8):
    """feats_*: (N, C, T, H, W) NCTHW pathway features (PyTorch layout).
       w_roi_rows: (M_pad*BINS_PAD, N*H*W) host-built ROIAlign weight rows.
       pw_t_pad / pb_pad: padded rt_projection params from pad_projection()."""
    N, C_s, _, H, W = feats_slow.shape
    C_f = feats_fast.shape[1]
    HW = H * W
    C_tot = C_s + C_f

    # AvgPool3d([T,1,1]) hoisted out of the ROI loop: one mean per image, spatial-major
    # layout so the ROIAlign contraction lands on RHS sublanes (no in-kernel transpose).
    mean_s = jnp.mean(feats_slow, axis=2).reshape(N, C_s, HW).transpose(0, 2, 1)
    mean_f = jnp.mean(feats_fast, axis=2).reshape(N, C_f, HW).transpose(0, 2, 1)
    mean_cat = jnp.concatenate([mean_s, mean_f], axis=-1).reshape(N * HW, C_tot)

    rows, P = w_roi_rows.shape
    assert P == N * HW
    M_pad = rows // BINS_PAD
    assert M_pad % roi_tile == 0
    K_pad = pw_t_pad.shape[-1]

    grid_spec = pltpu.PrefetchScalarGridSpec(
        num_scalar_prefetch=0,
        grid=(M_pad // roi_tile,),
        in_specs=[
            pl.BlockSpec((N * HW, C_tot), lambda r: (0, 0)),              # resident
            pl.BlockSpec((roi_tile * BINS_PAD, P), lambda r: (r, 0)),     # per-chunk
            pl.BlockSpec((C_tot, K_pad), lambda r: (0, 0)),               # resident
            pl.BlockSpec((1, K_pad), lambda r: (0, 0)),                   # resident
        ],
        out_specs=pl.BlockSpec((roi_tile, K_pad), lambda r: (r, 0)),
    )
    out_pad = pl.pallas_call(
        head_kernel,
        out_shape=jax.ShapeDtypeStruct((M_pad, K_pad), jnp.float32),
        grid_spec=grid_spec,
        compiler_params=pltpu.CompilerParams(dimension_semantics=("parallel",)),
    )(mean_cat, w_roi_rows, pw_t_pad, pb_pad)
    return out_pad[:num_rois, :num_classes]


if __name__ == "__main__":
    # Small config consistent with the module:
    #   width_per_group=1, BETA_INV=4 -> dim_in=[32, 8]
    #   NUM_FRAMES=8, ALPHA=4, POOL1=[[1,1,1],[1,1,1]] -> T_slow=2, T_fast=8
    #   feature map 8x8 ("sf_8x8"), spatial_scale=1/32, ROI resolution 7x7
    N, M = 2, 3
    C_s, C_f = 32, 8
    T_s, T_f = 2, 8
    H = W = 8
    HW = H * W
    num_classes = 10

    key = jax.random.PRNGKey(0)
    k1, k2, k3, k4 = jax.random.split(key, 4)

    # PyTorch layout NCTHW for each pathway.
    feats_slow = jax.random.normal(k1, (N, C_s, T_s, H, W), jnp.float32)
    feats_fast = jax.random.normal(k2, (N, C_f, T_f, H, W), jnp.float32)

    # bboxes0: [batch_idx, x1, y1, x2, y2] in input-image coords (0..256).
    bboxes = np.array([
        [0.0,  16.0,  32.0, 180.0, 200.0],
        [0.0,  64.0,  48.0, 240.0, 128.0],
        [1.0,   0.0,   0.0, 256.0, 256.0],
    ], dtype=np.float32)
    roi_tile = 8
    w_roi_rows_np, w49_np = build_roi_weight_rows(bboxes, 1.0 / 32.0, H, W, N, roi_tile=roi_tile)
    w_roi_rows = jnp.asarray(w_roi_rows_np)

    # rt_projection params (deterministic synthetic init).
    pw = jax.random.normal(k3, (num_classes, C_s + C_f), jnp.float32) * 0.02
    pb = jax.random.normal(k4, (1, num_classes), jnp.float32) * 0.02
    pw_t_pad, pb_pad = pad_projection(np.asarray(pw), np.asarray(pb))

    out = head_forward(feats_slow, feats_fast, w_roi_rows, pw_t_pad, pb_pad,
                       num_rois=M, num_classes=num_classes, roi_tile=roi_tile)
    out = jax.block_until_ready(out)

    # Pure-JAX reference of the same math (sanity check of the kernel lowering).
    batch_idx = jnp.asarray(bboxes[:, 0].astype(np.int32))
    fs_m = jnp.mean(feats_slow, axis=2).reshape(N, C_s, HW)[batch_idx]   # (M, C_s, HW)
    ff_m = jnp.mean(feats_fast, axis=2).reshape(N, C_f, HW)[batch_idx]   # (M, C_f, HW)
    w49 = jnp.asarray(w49_np)
    bins_s = jnp.einsum('mbp,mcp->mbc', w49, fs_m)
    bins_f = jnp.einsum('mbp,mcp->mbc', w49, ff_m)
    x_ref = jnp.concatenate([bins_s.max(axis=1), bins_f.max(axis=1)], axis=-1)
    ref = jax.nn.softmax(x_ref @ pw.T + pb, axis=-1)
    np.testing.assert_allclose(np.asarray(out), np.asarray(ref), rtol=1e-4, atol=1e-5)

    assert out.shape == (M, num_classes)
    print("KERNEL_OK")
</pallas_src>

<mosaic_0001>
module attributes {stable_mosaic.version = 11 : i64} {
  func.func @head_kernel(%arg0: i32, %arg1: memref<128x40xf32, #tpu.memory_space<vmem>>, %arg2: memref<448x128xf32, #tpu.memory_space<vmem>>, %arg3: memref<40x128xf32, #tpu.memory_space<vmem>>, %arg4: memref<1x128xf32, #tpu.memory_space<vmem>>, %arg5: memref<8x128xf32, #tpu.memory_space<vmem>>) attributes {dimension_semantics = [#tpu.dimension_semantics<parallel>], iteration_bounds = array<i64: 1>, scalar_prefetch = 0 : i64, scratch_operands = 0 : i64, tpu.core_type = #tpu.core_type<tc>, window_params = [{pipeline_mode = #tpu.pipeline_mode<synchronous>, transform_indices = @transform_0, window_bounds = array<i64: 128, 40>}, {transform_indices = @transform_1, window_bounds = array<i64: 448, 128>}, {pipeline_mode = #tpu.pipeline_mode<synchronous>, transform_indices = @transform_2, window_bounds = array<i64: 40, 128>}, {pipeline_mode = #tpu.pipeline_mode<synchronous>, transform_indices = @transform_3, window_bounds = array<i64: 1, 128>}, {transform_indices = @transform_4, window_bounds = array<i64: 8, 128>}]} {
    %c0 = arith.constant 0 : index
    %c0_0 = arith.constant 0 : index
    %0 = vector.load %arg2[%c0, %c0_0] : memref<448x128xf32, #tpu.memory_space<vmem>>, vector<448x128xf32>
    %c0_1 = arith.constant 0 : index
    %c0_2 = arith.constant 0 : index
    %1 = vector.load %arg1[%c0_1, %c0_2] : memref<128x40xf32, #tpu.memory_space<vmem>>, vector<128x40xf32>
    %cst = arith.constant dense<0.000000e+00> : vector<448x40xf32>
    %2 = tpu.matmul %0, %1, %cst {dimension_numbers = #tpu.dot_dimension_numbers<[1], [0], [0], [1], [0, 0, 1, 1], [], []>} : vector<448x128xf32>, vector<128x40xf32>, vector<448x40xf32> -> vector<448x40xf32>
    %3 = vector.shape_cast %2 : vector<448x40xf32> to vector<8x56x40xf32>
    %cst_3 = arith.constant dense<0xFF800000> : vector<8x40xf32>
    %4 = vector.multi_reduction <maximumf>, %3, %cst_3 [1] : vector<8x56x40xf32> to vector<8x40xf32>
    %c0_4 = arith.constant 0 : index
    %c0_5 = arith.constant 0 : index
    %5 = vector.load %arg3[%c0_4, %c0_5] : memref<40x128xf32, #tpu.memory_space<vmem>>, vector<40x128xf32>
    %cst_6 = arith.constant dense<0.000000e+00> : vector<8x128xf32>
    %6 = tpu.matmul %4, %5, %cst_6 {dimension_numbers = #tpu.dot_dimension_numbers<[1], [0], [0], [1], [0, 0, 1, 1], [], []>} : vector<8x40xf32>, vector<40x128xf32>, vector<8x128xf32> -> vector<8x128xf32>
    %c0_7 = arith.constant 0 : index
    %c0_8 = arith.constant 0 : index
    %7 = vector.load %arg4[%c0_7, %c0_8] : memref<1x128xf32, #tpu.memory_space<vmem>>, vector<1x128xf32>
    %8 = vector.broadcast %7 : vector<1x128xf32> to vector<8x128xf32>
    %9 = arith.addf %6, %8 : vector<8x128xf32>
    %cst_9 = arith.constant dense<0xFF800000> : vector<8xf32>
    %10 = vector.multi_reduction <maximumf>, %9, %cst_9 [1] : vector<8x128xf32> to vector<8xf32>
    %11 = vector.shape_cast %10 : vector<8xf32> to vector<8x1xf32>
    %12 = vector.broadcast %11 : vector<8x1xf32> to vector<8x128xf32>
    %13 = arith.subf %9, %12 : vector<8x128xf32>
    %14 = math.exp %13 : vector<8x128xf32>
    %cst_10 = arith.constant dense<0.000000e+00> : vector<8xf32>
    %15 = vector.multi_reduction <add>, %14, %cst_10 [1] : vector<8x128xf32> to vector<8xf32>
    %16 = vector.shape_cast %15 : vector<8xf32> to vector<8x1xf32>
    %17 = vector.broadcast %16 : vector<8x1xf32> to vector<8x128xf32>
    %18 = arith.divf %14, %17 : vector<8x128xf32>
    %c0_11 = arith.constant 0 : index
    %c0_12 = arith.constant 0 : index
    %19 = vector.load %arg5[%c0_11, %c0_12] : memref<8x128xf32, #tpu.memory_space<vmem>>, vector<8x128xf32>
    tpu.vector_store %arg5[%c0_11, %c0_12], %18 {strides = array<i32>} : memref<8x128xf32, #tpu.memory_space<vmem>>, vector<8x128xf32>,
    return
  }
  func.func @transform_0(%arg0: i32) -> (i32, i32) {
    %c0_i32 = arith.constant 0 : i32
    %c0_i32_0 = arith.constant 0 : i32
    %c0_i32_1 = arith.constant 0 : i32
    return %c0_i32, %c0_i32_0 : i32, i32
  }
  func.func @transform_1(%arg0: i32) -> (i32, i32) {
    %c0_i32 = arith.constant 0 : i32
    %c0_i32_0 = arith.constant 0 : i32
    return %arg0, %c0_i32 : i32, i32
  }
  func.func @transform_2(%arg0: i32) -> (i32, i32) {
    %c0_i32 = arith.constant 0 : i32
    %c0_i32_0 = arith.constant 0 : i32
    %c0_i32_1 = arith.constant 0 : i32
    return %c0_i32, %c0_i32_0 : i32, i32
  }
  func.func @transform_3(%arg0: i32) -> (i32, i32) {
    %c0_i32 = arith.constant 0 : i32
    %c0_i32_0 = arith.constant 0 : i32
    %c0_i32_1 = arith.constant 0 : i32
    return %c0_i32, %c0_i32_0 : i32, i32
  }
  func.func @transform_4(%arg0: i32) -> (i32, i32) {
    %c0_i32 = arith.constant 0 : i32
    %c0_i32_0 = arith.constant 0 : i32
    return %arg0, %c0_i32 : i32, i32
  }
}

</mosaic_0001>

<llo_original>
// kernel: tpu_custom_call.1
$region0: #{tpu_custom_call.1}
  #allocation0 [shape = 'u32[]', space=smem, size = 0x4, offset = 0x4, fixed_abs, tag = 'smem constant byte address 0x4 - core index']
  #allocation1 [shape = 'u32[72,128]{1,0:T(1,128)}', space=vmem, size = 0x9000, scoped, tag = 'internal scratch']
  %s0 = inlined_call_operand.vmem [shape: f32[128,40], index: 0, kind: input, shape index: {}]
  %s1 = inlined_call_operand.hbm [shape: f32[448,128], index: 1, kind: input, shape index: {}]
  %s2 = inlined_call_operand.vmem [shape: f32[40,128], index: 2, kind: input, shape index: {}]
  %s3 = inlined_call_operand.vmem [shape: f32[1,128], index: 3, kind: input, shape index: {}]
  %s4 = inlined_call_operand.hbm [shape: f32[8,128], index: 4, kind: output, shape index: {}]
  %s5 = sld [smem:[#allocation0]]
  $region30: #{tpu_custom_call.1} parent=0
    _
  %s7 = ssub.s32 1, %s5
  %s8 = scalar_select 0, %s7, %s5
  $region1: #{tpu_custom_call.1} parent=0
    #allocation2 [shape = 'u8[229376]{0}', space=vmem, size = 0x38000, scoped, tag = 'input window, operand 1, single buffered']
    #allocation3 [shape = 's32[1]{0}', space=sflag, size = 0x4, scoped, tag = 'scoped memory for tpu_custom_call.1']
    #allocation4 [shape = 's32[1]{0}', space=sflag, size = 0x4, scoped, tag = 'scoped memory for tpu_custom_call.1']
    #allocation5 [shape = 'u8[4096]{0}', space=vmem, size = 0x1000, scoped, tag = 'output window, operand 0, single buffered']
    %9 = vsyncpa [#allocation3], 0
    %10 = vsyncpa [#allocation4], 0
    // Predicated region
    $region2: #{tpu_custom_call.1} parent=1 // pred_check
      _
    $region3: #{tpu_custom_call.1} parent=1 // pred_check_branch
      %12 = sbr.rel (0) target = $region5
    $region4: #{tpu_custom_call.1} parent=1 // pred_region
      _
    $region5: #{tpu_custom_call.1} parent=1 // pred_fallthru
      _
    // Predicated region
    $region6: #{tpu_custom_call.1} parent=1 // pred_check
      _
    $region7: #{tpu_custom_call.1} parent=1 // pred_check_branch
      %14 = sbr.rel (0) target = $region9
    $region8: #{tpu_custom_call.1} parent=1 // pred_region
      %16 = vsyncadd [#allocation3], 0
      %s17 = sshll.u32 %s1, 4
      %s18 = int_to_ptr.hbm [resolvable:$true] %s17
      %s19 = sshll.u32 [#allocation2], 4
      %s20 = int_to_ptr.vmem [resolvable:$true] %s19
      %25 = dma.hbm_to_vmem [thread:$0]  %s18, 7168, %s20, [#allocation3], 128, 128, 8
    $region9: #{tpu_custom_call.1} parent=1 // pred_fallthru
      _
    // Predicated region
    $region10: #{tpu_custom_call.1} parent=1 // pred_check
      _
    $region11: #{tpu_custom_call.1} parent=1 // pred_check_branch
      %27 = sbr.rel (0) target = $region13
    $region12: #{tpu_custom_call.1} parent=1 // pred_region
      _
    $region13: #{tpu_custom_call.1} parent=1 // pred_fallthru
      _
    // Predicated region
    $region14: #{tpu_custom_call.1} parent=1 // pred_check
      _
    $region15: #{tpu_custom_call.1} parent=1 // pred_check_branch
      %29 = sbr.rel (0) target = $region17
    $region16: #{tpu_custom_call.1} parent=1 // pred_region
      _
    $region17: #{tpu_custom_call.1} parent=1 // pred_fallthru
      _
    // Predicated region
    $region18: #{tpu_custom_call.1} parent=1 // pred_check
      _
    $region19: #{tpu_custom_call.1} parent=1 // pred_check_branch
      %31 = sbr.rel (0) target = $region21
    $region20: #{tpu_custom_call.1} parent=1 // pred_region
      %33 = dma.done [#allocation3], 7168
    $region21: #{tpu_custom_call.1} parent=1 // pred_fallthru
      _
    %v34 = vld [vmem:[#allocation2] sm:$0xff]
    %v35 = vld [vmem:[#allocation2 + $0x8] sm:$0xff]
    %v36 = vld [vmem:[#allocation2 + $0x10] sm:$0xff]
    %v37 = vld [vmem:[#allocation2 + $0x18] sm:$0xff]
    %v38 = vld [vmem:[#allocation2 + $0x20] sm:$0xff]
    %v39 = vld [vmem:[#allocation2 + $0x28] sm:$0xff]
    %v40 = vld [vmem:[#allocation2 + $0x30] sm:$0xff]
    %v41 = vld [vmem:[#allocation2 + $0x38] sm:$0xff]
    %v42 = vld [vmem:[#allocation2 + $0x40] sm:$0xff]
    %v43 = vld [vmem:[#allocation2 + $0x48] sm:$0xff]
    %v44 = vld [vmem:[#allocation2 + $0x50] sm:$0xff]
    %v45 = vld [vmem:[#allocation2 + $0x58] sm:$0xff]
    %v46 = vld [vmem:[#allocation2 + $0x60] sm:$0xff]
    %v47 = vld [vmem:[#allocation2 + $0x68] sm:$0xff]
    %v48 = vld [vmem:[#allocation2 + $0x70] sm:$0xff]
    %v49 = vld [vmem:[#allocation2 + $0x78] sm:$0xff]
    %v50 = vld [vmem:[#allocation2 + $0x80] sm:$0xff]
    %v51 = vld [vmem:[#allocation2 + $0x88] sm:$0xff]
    %v52 = vld [vmem:[#allocation2 + $0x90] sm:$0xff]
    %v53 = vld [vmem:[#allocation2 + $0x98] sm:$0xff]
    %v54 = vld [vmem:[#allocation2 + $0xa0] sm:$0xff]
    %v55 = vld [vmem:[#allocation2 + $0xa8] sm:$0xff]
    %v56 = vld [vmem:[#allocation2 + $0xb0] sm:$0xff]
    %v57 = vld [vmem:[#allocation2 + $0xb8] sm:$0xff]
    %v58 = vld [vmem:[#allocation2 + $0xc0] sm:$0xff]
    %v59 = vld [vmem:[#allocation2 + $0xc8] sm:$0xff]
    %v60 = vld [vmem:[#allocation2 + $0xd0] sm:$0xff]
    %v61 = vld [vmem:[#allocation2 + $0xd8] sm:$0xff]
    %v62 = vld [vmem:[#allocation2 + $0xe0] sm:$0xff]
    %v63 = vld [vmem:[#allocation2 + $0xe8] sm:$0xff]
    %v64 = vld [vmem:[#allocation2 + $0xf0] sm:$0xff]
    %v65 = vld [vmem:[#allocation2 + $0xf8] sm:$0xff]
    %v66 = vld [vmem:[#allocation2 + $0x100] sm:$0xff]
    %v67 = vld [vmem:[#allocation2 + $0x108] sm:$0xff]
    %v68 = vld [vmem:[#allocation2 + $0x110] sm:$0xff]
    %v69 = vld [vmem:[#allocation2 + $0x118] sm:$0xff]
    %v70 = vld [vmem:[#allocation2 + $0x120] sm:$0xff]
    %v71 = vld [vmem:[#allocation2 + $0x128] sm:$0xff]
    %v72 = vld [vmem:[#allocation2 + $0x130] sm:$0xff]
    %v73 = vld [vmem:[#allocation2 + $0x138] sm:$0xff]
    %v74 = vld [vmem:[#allocation2 + $0x140] sm:$0xff]
    %v75 = vld [vmem:[#allocation2 + $0x148] sm:$0xff]
    %v76 = vld [vmem:[#allocation2 + $0x150] sm:$0xff]
    %v77 = vld [vmem:[#allocation2 + $0x158] sm:$0xff]
    %v78 = vld [vmem:[#allocation2 + $0x160] sm:$0xff]
    %v79 = vld [vmem:[#allocation2 + $0x168] sm:$0xff]
    %v80 = vld [vmem:[#allocation2 + $0x170] sm:$0xff]
    %v81 = vld [vmem:[#allocation2 + $0x178] sm:$0xff]
    %v82 = vld [vmem:[#allocation2 + $0x180] sm:$0xff]
    %v83 = vld [vmem:[#allocation2 + $0x188] sm:$0xff]
    %v84 = vld [vmem:[#allocation2 + $0x190] sm:$0xff]
    %v85 = vld [vmem:[#allocation2 + $0x198] sm:$0xff]
    %v86 = vld [vmem:[#allocation2 + $0x1a0] sm:$0xff]
    %v87 = vld [vmem:[#allocation2 + $0x1a8] sm:$0xff]
    %v88 = vld [vmem:[#allocation2 + $0x1b0] sm:$0xff]
    %v89 = vld [vmem:[#allocation2 + $0x1b8] sm:$0xff]
    %v90 = vld [vmem:[%s0] sm:$0xff]
    %v91 = vld [vmem:[%s0 + $0x8] sm:$0xff]
    %v92 = vld [vmem:[%s0 + $0x10] sm:$0xff]
    %v93 = vld [vmem:[%s0 + $0x18] sm:$0xff]
    %v94 = vld [vmem:[%s0 + $0x20] sm:$0xff]
    %v95 = vld [vmem:[%s0 + $0x28] sm:$0xff]
    %v96 = vld [vmem:[%s0 + $0x30] sm:$0xff]
    %v97 = vld [vmem:[%s0 + $0x38] sm:$0xff]
    %v98 = vld [vmem:[%s0 + $0x40] sm:$0xff]
    %v99 = vld [vmem:[%s0 + $0x48] sm:$0xff]
    %v100 = vld [vmem:[%s0 + $0x50] sm:$0xff]
    %v101 = vld [vmem:[%s0 + $0x58] sm:$0xff]
    %v102 = vld [vmem:[%s0 + $0x60] sm:$0xff]
    %v103 = vld [vmem:[%s0 + $0x68] sm:$0xff]
    %v104 = vld [vmem:[%s0 + $0x70] sm:$0xff]
    %v105 = vld [vmem:[%s0 + $0x78] sm:$0xff]
    %106 = vmatpush.msra.mxu0 %v105
    %107 = vmatpush.msra.mxu0 %v104
    %108 = vmatpush.msra.mxu0 %v103
    %109 = vmatpush.msra.mxu0 %v102
    %110 = vmatpush.msra.mxu0 %v101
    %111 = vmatpush.msra.mxu0 %v100
    %112 = vmatpush.msra.mxu0 %v99
    %113 = vmatpush.msra.mxu0 %v98
    %114 = vmatpush.msra.mxu0 %v97
    %115 = vmatpush.msra.mxu0 %v96
    %116 = vmatpush.msra.mxu0 %v95
    %117 = vmatpush.msra.mxu0 %v94
    %118 = vmatpush.msra.mxu0 %v93
    %119 = vmatpush.msra.mxu0 %v92
    %120 = vmatpush.msra.mxu0 %v91
    %121 = vmatpush.msra.mxu0 %v90
    %122 = vmatmul.f32.gmra.mxu0 %v34
    %v123 = vpop.f32.mrf.mxu0
    %v124 = vadd.f32 0.0, %v123
    %125 = vmatmul.f32.gmra.mxu0 %v35
    %v126 = vpop.f32.mrf.mxu0
    %v127 = vadd.f32 0.0, %v126
    %128 = vmatmul.f32.gmra.mxu0 %v36
    %v129 = vpop.f32.mrf.mxu0
    %v130 = vadd.f32 0.0, %v129
    %131 = vmatmul.f32.gmra.mxu0 %v37
    %v132 = vpop.f32.mrf.mxu0
    %v133 = vadd.f32 0.0, %v132
    %134 = vmatmul.f32.gmra.mxu0 %v38
    %v135 = vpop.f32.mrf.mxu0
    %v136 = vadd.f32 0.0, %v135
    %137 = vmatmul.f32.gmra.mxu0 %v39
    %v138 = vpop.f32.mrf.mxu0
    %v139 = vadd.f32 0.0, %v138
    %140 = vmatmul.f32.gmra.mxu0 %v40
    %v141 = vpop.f32.mrf.mxu0
    %v142 = vadd.f32 0.0, %v141
    %143 = vmatmul.f32.gmra.mxu0 %v41
    %v144 = vpop.f32.mrf.mxu0
    %v145 = vadd.f32 0.0, %v144
    %146 = vmatmul.f32.gmra.mxu0 %v42
    %v147 = vpop.f32.mrf.mxu0
    %v148 = vadd.f32 0.0, %v147
    %149 = vmatmul.f32.gmra.mxu0 %v43
    %v150 = vpop.f32.mrf.mxu0
    %v151 = vadd.f32 0.0, %v150
    %152 = vmatmul.f32.gmra.mxu0 %v44
    %v153 = vpop.f32.mrf.mxu0
    %v154 = vadd.f32 0.0, %v153
    %155 = vmatmul.f32.gmra.mxu0 %v45
    %v156 = vpop.f32.mrf.mxu0
    %v157 = vadd.f32 0.0, %v156
    %158 = vmatmul.f32.gmra.mxu0 %v46
    %v159 = vpop.f32.mrf.mxu0
    %v160 = vadd.f32 0.0, %v159
    %161 = vmatmul.f32.gmra.mxu0 %v47
    %v162 = vpop.f32.mrf.mxu0
    %v163 = vadd.f32 0.0, %v162
    %164 = vmatmul.f32.gmra.mxu0 %v48
    %v165 = vpop.f32.mrf.mxu0
    %v166 = vadd.f32 0.0, %v165
    %167 = vmatmul.f32.gmra.mxu0 %v49
    %v168 = vpop.f32.mrf.mxu0
    %v169 = vadd.f32 0.0, %v168
    %170 = vmatmul.f32.gmra.mxu0 %v50
    %v171 = vpop.f32.mrf.mxu0
    %v172 = vadd.f32 0.0, %v171
    %173 = vmatmul.f32.gmra.mxu0 %v51
    %v174 = vpop.f32.mrf.mxu0
    %v175 = vadd.f32 0.0, %v174
    %176 = vmatmul.f32.gmra.mxu0 %v52
    %v177 = vpop.f32.mrf.mxu0
    %v178 = vadd.f32 0.0, %v177
    %179 = vmatmul.f32.gmra.mxu0 %v53
    %v180 = vpop.f32.mrf.mxu0
    %v181 = vadd.f32 0.0, %v180
    %182 = vmatmul.f32.gmra.mxu0 %v54
    %v183 = vpop.f32.mrf.mxu0
    %v184 = vadd.f32 0.0, %v183
    %185 = vmatmul.f32.gmra.mxu0 %v55
    %v186 = vpop.f32.mrf.mxu0
    %v187 = vadd.f32 0.0, %v186
    %188 = vmatmul.f32.gmra.mxu0 %v56
    %v189 = vpop.f32.mrf.mxu0
    %v190 = vadd.f32 0.0, %v189
    %191 = vmatmul.f32.gmra.mxu0 %v57
    %v192 = vpop.f32.mrf.mxu0
    %v193 = vadd.f32 0.0, %v192
    %194 = vmatmul.f32.gmra.mxu0 %v58
    %v195 = vpop.f32.mrf.mxu0
    %v196 = vadd.f32 0.0, %v195
    %197 = vmatmul.f32.gmra.mxu0 %v59
    %v198 = vpop.f32.mrf.mxu0
    %v199 = vadd.f32 0.0, %v198
    %200 = vmatmul.f32.gmra.mxu0 %v60
    %v201 = vpop.f32.mrf.mxu0
    %v202 = vadd.f32 0.0, %v201
    %203 = vmatmul.f32.gmra.mxu0 %v61
    %v204 = vpop.f32.mrf.mxu0
    %v205 = vadd.f32 0.0, %v204
    %206 = vmatmul.f32.gmra.mxu0 %v62
    %v207 = vpop.f32.mrf.mxu0
    %v208 = vadd.f32 0.0, %v207
    %209 = vmatmul.f32.gmra.mxu0 %v63
    %v210 = vpop.f32.mrf.mxu0
    %v211 = vadd.f32 0.0, %v210
    %212 = vmatmul.f32.gmra.mxu0 %v64
    %v213 = vpop.f32.mrf.mxu0
    %v214 = vadd.f32 0.0, %v213
    %215 = vmatmul.f32.gmra.mxu0 %v65
    %v216 = vpop.f32.mrf.mxu0
    %v217 = vadd.f32 0.0, %v216
    %218 = vmatmul.f32.gmra.mxu0 %v66
    %v219 = vpop.f32.mrf.mxu0
    %v220 = vadd.f32 0.0, %v219
    %221 = vmatmul.f32.gmra.mxu0 %v67
    %v222 = vpop.f32.mrf.mxu0
    %v223 = vadd.f32 0.0, %v222
    %224 = vmatmul.f32.gmra.mxu0 %v68
    %v225 = vpop.f32.mrf.mxu0
    %v226 = vadd.f32 0.0, %v225
    %227 = vmatmul.f32.gmra.mxu0 %v69
    %v228 = vpop.f32.mrf.mxu0
    %v229 = vadd.f32 0.0, %v228
    %230 = vmatmul.f32.gmra.mxu0 %v70
    %v231 = vpop.f32.mrf.mxu0
    %v232 = vadd.f32 0.0, %v231
    %233 = vmatmul.f32.gmra.mxu0 %v71
    %v234 = vpop.f32.mrf.mxu0
    %v235 = vadd.f32 0.0, %v234
    %236 = vmatmul.f32.gmra.mxu0 %v72
    %v237 = vpop.f32.mrf.mxu0
    %v238 = vadd.f32 0.0, %v237
    %239 = vmatmul.f32.gmra.mxu0 %v73
    %v240 = vpop.f32.mrf.mxu0
    %v241 = vadd.f32 0.0, %v240
    %242 = vmatmul.f32.gmra.mxu0 %v74
    %v243 = vpop.f32.mrf.mxu0
    %v244 = vadd.f32 0.0, %v243
    %245 = vmatmul.f32.gmra.mxu0 %v75
    %v246 = vpop.f32.mrf.mxu0
    %v247 = vadd.f32 0.0, %v246
    %248 = vmatmul.f32.gmra.mxu0 %v76
    %v249 = vpop.f32.mrf.mxu0
    %v250 = vadd.f32 0.0, %v249
    %251 = vmatmul.f32.gmra.mxu0 %v77
    %v252 = vpop.f32.mrf.mxu0
    %v253 = vadd.f32 0.0, %v252
    %254 = vmatmul.f32.gmra.mxu0 %v78
    %v255 = vpop.f32.mrf.mxu0
    %v256 = vadd.f32 0.0, %v255
    %257 = vmatmul.f32.gmra.mxu0 %v79
    %v258 = vpop.f32.mrf.mxu0
    %v259 = vadd.f32 0.0, %v258
    %260 = vmatmul.f32.gmra.mxu0 %v80
    %v261 = vpop.f32.mrf.mxu0
    %v262 = vadd.f32 0.0, %v261
    %263 = vmatmul.f32.gmra.mxu0 %v81
    %v264 = vpop.f32.mrf.mxu0
    %v265 = vadd.f32 0.0, %v264
    %266 = vmatmul.f32.gmra.mxu0 %v82
    %v267 = vpop.f32.mrf.mxu0
    %v268 = vadd.f32 0.0, %v267
    %269 = vmatmul.f32.gmra.mxu0 %v83
    %v270 = vpop.f32.mrf.mxu0
    %v271 = vadd.f32 0.0, %v270
    %272 = vmatmul.f32.gmra.mxu0 %v84
    %v273 = vpop.f32.mrf.mxu0
    %v274 = vadd.f32 0.0, %v273
    %275 = vmatmul.f32.gmra.mxu0 %v85
    %v276 = vpop.f32.mrf.mxu0
    %v277 = vadd.f32 0.0, %v276
    %278 = vmatmul.f32.gmra.mxu0 %v86
    %v279 = vpop.f32.mrf.mxu0
    %v280 = vadd.f32 0.0, %v279
    %281 = vmatmul.f32.gmra.mxu0 %v87
    %v282 = vpop.f32.mrf.mxu0
    %v283 = vadd.f32 0.0, %v282
    %284 = vmatmul.f32.gmra.mxu0 %v88
    %v285 = vpop.f32.mrf.mxu0
    %v286 = vadd.f32 0.0, %v285
    %287 = vmatmul.f32.gmra.mxu0 %v89
    %v288 = vpop.f32.mrf.mxu0
    %v289 = vadd.f32 0.0, %v288
    %290 = vdwg.mxu0
    %vm291 = vcmask 326656
    %v292 = vsel %vm291, %v124, -inf
    %v293 = vsel %vm291, %v127, -inf
    %v294 = vmax.f32 %v292, %v293
    %v295 = vsel %vm291, %v130, -inf
    %v296 = vmax.f32 %v294, %v295
    %v297 = vsel %vm291, %v133, -inf
    %v298 = vmax.f32 %v296, %v297
    %v299 = vsel %vm291, %v136, -inf
    %v300 = vmax.f32 %v298, %v299
    %v301 = vsel %vm291, %v139, -inf
    %v302 = vmax.f32 %v300, %v301
    %v303 = vsel %vm291, %v142, -inf
    %v304 = vmax.f32 %v302, %v303
    %v305 = vrot.slane %v304, 4
    %v306 = vmax.f32 %v304, %v305
    %v307 = vrot.slane %v306, 2
    %v308 = vmax.f32 %v306, %v307
    %v309 = vrot.slane %v308, 1
    %v310 = vmax.f32 %v308, %v309
    %v311 = vsel %vm291, %v145, -inf
    %v312 = vsel %vm291, %v148, -inf
    %v313 = vmax.f32 %v311, %v312
    %v314 = vsel %vm291, %v151, -inf
    %v315 = vmax.f32 %v313, %v314
    %v316 = vsel %vm291, %v154, -inf
    %v317 = vmax.f32 %v315, %v316
    %v318 = vsel %vm291, %v157, -inf
    %v319 = vmax.f32 %v317, %v318
    %v320 = vsel %vm291, %v160, -inf
    %v321 = vmax.f32 %v319, %v320
    %v322 = vsel %vm291, %v163, -inf
    %v323 = vmax.f32 %v321, %v322
    %v324 = vrot.slane %v323, 4
    %v325 = vmax.f32 %v323, %v324
    %v326 = vrot.slane %v325, 2
    %v327 = vmax.f32 %v325, %v326
    %v328 = vrot.slane %v327, 1
    %v329 = vmax.f32 %v327, %v328
    %v330 = vsel %vm291, %v166, -inf
    %v331 = vsel %vm291, %v169, -inf
    %v332 = vmax.f32 %v330, %v331
    %v333 = vsel %vm291, %v172, -inf
    %v334 = vmax.f32 %v332, %v333
    %v335 = vsel %vm291, %v175, -inf
    %v336 = vmax.f32 %v334, %v335
    %v337 = vsel %vm291, %v178, -inf
    %v338 = vmax.f32 %v336, %v337
    %v339 = vsel %vm291, %v181, -inf
    %v340 = vmax.f32 %v338, %v339
    %v341 = vsel %vm291, %v184, -inf
    %v342 = vmax.f32 %v340, %v341
    %v343 = vrot.slane %v342, 4
    %v344 = vmax.f32 %v342, %v343
    %v345 = vrot.slane %v344, 2
    %v346 = vmax.f32 %v344, %v345
    %v347 = vrot.slane %v346, 1
    %v348 = vmax.f32 %v346, %v347
    %v349 = vsel %vm291, %v187, -inf
    %v350 = vsel %vm291, %v190, -inf
    %v351 = vmax.f32 %v349, %v350
    %v352 = vsel %vm291, %v193, -inf
    %v353 = vmax.f32 %v351, %v352
    %v354 = vsel %vm291, %v196, -inf
    %v355 = vmax.f32 %v353, %v354
    %v356 = vsel %vm291, %v199, -inf
    %v357 = vmax.f32 %v355, %v356
    %v358 = vsel %vm291, %v202, -inf
    %v359 = vmax.f32 %v357, %v358
    %v360 = vsel %vm291, %v205, -inf
    %v361 = vmax.f32 %v359, %v360
    %v362 = vrot.slane %v361, 4
    %v363 = vmax.f32 %v361, %v362
    %v364 = vrot.slane %v363, 2
    %v365 = vmax.f32 %v363, %v364
    %v366 = vrot.slane %v365, 1
    %v367 = vmax.f32 %v365, %v366
    %v368 = vsel %vm291, %v208, -inf
    %v369 = vsel %vm291, %v211, -inf
    %v370 = vmax.f32 %v368, %v369
    %v371 = vsel %vm291, %v214, -inf
    %v372 = vmax.f32 %v370, %v371
    %v373 = vsel %vm291, %v217, -inf
    %v374 = vmax.f32 %v372, %v373
    %v375 = vsel %vm291, %v220, -inf
    %v376 = vmax.f32 %v374, %v375
    %v377 = vsel %vm291, %v223, -inf
    %v378 = vmax.f32 %v376, %v377
    %v379 = vsel %vm291, %v226, -inf
    %v380 = vmax.f32 %v378, %v379
    %v381 = vrot.slane %v380, 4
    %v382 = vmax.f32 %v380, %v381
    %v383 = vrot.slane %v382, 2
    %v384 = vmax.f32 %v382, %v383
    %v385 = vrot.slane %v384, 1
    %v386 = vmax.f32 %v384, %v385
    %v387 = vsel %vm291, %v229, -inf
    %v388 = vsel %vm291, %v232, -inf
    %v389 = vmax.f32 %v387, %v388
    %v390 = vsel %vm291, %v235, -inf
    %v391 = vmax.f32 %v389, %v390
    %v392 = vsel %vm291, %v238, -inf
    %v393 = vmax.f32 %v391, %v392
    %v394 = vsel %vm291, %v241, -inf
    %v395 = vmax.f32 %v393, %v394
    %v396 = vsel %vm291, %v244, -inf
    %v397 = vmax.f32 %v395, %v396
    %v398 = vsel %vm291, %v247, -inf
    %v399 = vmax.f32 %v397, %v398
    %v400 = vrot.slane %v399, 4
    %v401 = vmax.f32 %v399, %v400
    %v402 = vrot.slane %v401, 2
    %v403 = vmax.f32 %v401, %v402
    %v404 = vrot.slane %v403, 1
    %v405 = vmax.f32 %v403, %v404
    %v406 = vsel %vm291, %v250, -inf
    %v407 = vsel %vm291, %v253, -inf
    %v408 = vmax.f32 %v406, %v407
    %v409 = vsel %vm291, %v256, -inf
    %v410 = vmax.f32 %v408, %v409
    %v411 = vsel %vm291, %v259, -inf
    %v412 = vmax.f32 %v410, %v411
    %v413 = vsel %vm291, %v262, -inf
    %v414 = vmax.f32 %v412, %v413
    %v415 = vsel %vm291, %v265, -inf
    %v416 = vmax.f32 %v414, %v415
    %v417 = vsel %vm291, %v268, -inf
    %v418 = vmax.f32 %v416, %v417
    %v419 = vrot.slane %v418, 4
    %v420 = vmax.f32 %v418, %v419
    %v421 = vrot.slane %v420, 2
    %v422 = vmax.f32 %v420, %v421
    %v423 = vrot.slane %v422, 1
    %v424 = vmax.f32 %v422, %v423
    %v425 = vsel %vm291, %v271, -inf
    %v426 = vsel %vm291, %v274, -inf
    %v427 = vmax.f32 %v425, %v426
    %v428 = vsel %vm291, %v277, -inf
    %v429 = vmax.f32 %v427, %v428
    %v430 = vsel %vm291, %v280, -inf
    %v431 = vmax.f32 %v429, %v430
    %v432 = vsel %vm291, %v283, -inf
    %v433 = vmax.f32 %v431, %v432
    %v434 = vsel %vm291, %v286, -inf
    %v435 = vmax.f32 %v433, %v434
    %v436 = vsel %vm291, %v289, -inf
    %v437 = vmax.f32 %v435, %v436
    %v438 = vrot.slane %v437, 4
    %v439 = vmax.f32 %v437, %v438
    %v440 = vrot.slane %v439, 2
    %v441 = vmax.f32 %v439, %v440
    %v442 = vrot.slane %v441, 1
    %v443 = vmax.f32 %v441, %v442
    %v444 = vld [vmem:[%s2] sm:$0xff]
    %v445 = vld [vmem:[%s2 + $0x8] sm:$0xff]
    %v446 = vld [vmem:[%s2 + $0x10] sm:$0xff]
    %v447 = vld [vmem:[%s2 + $0x18] sm:$0xff]
    %v448 = vld [vmem:[%s2 + $0x20] sm:$0xff]
    %v449 = vld [vmem:[%s3] sm:$0x1]
    %v451 = vperm.slane %v449, 0
    %vm461 = vcmask 1041409
    %v462 = vsel %vm461, %v329, %v310
    %vm463 = vcmask 1042434
    %v464 = vsel %vm463, %v348, %v462
    %vm465 = vcmask 1043459
    %v466 = vsel %vm465, %v367, %v464
    %vm467 = vcmask 1044484
    %v468 = vsel %vm467, %v386, %v466
    %vm469 = vcmask 1045509
    %v470 = vsel %vm469, %v405, %v468
    %vm471 = vcmask 1046534
    %v472 = vsel %vm471, %v424, %v470
    %vm473 = vcmask 1047559
    %v474 = vsel %vm473, %v443, %v472
    %v475 = vsel %vm291, %v474, 0
    %477 = vmatpush.msra.mxu0 0.0
    %478 = vmatpush.msra.mxu0 0.0
    %479 = vmatpush.msra.mxu0 0.0
    %480 = vmatpush.msra.mxu0 0.0
    %481 = vmatpush.msra.mxu0 0.0
    %482 = vmatpush.msra.mxu0 0.0
    %483 = vmatpush.msra.mxu0 0.0
    %484 = vmatpush.msra.mxu0 0.0
    %485 = vmatpush.msra.mxu0 0.0
    %486 = vmatpush.msra.mxu0 0.0
    %487 = vmatpush.msra.mxu0 0.0
    %488 = vmatpush.msra.mxu0 %v448
    %489 = vmatpush.msra.mxu0 %v447
    %490 = vmatpush.msra.mxu0 %v446
    %491 = vmatpush.msra.mxu0 %v445
    %492 = vmatpush.msra.mxu0 %v444
    %493 = vmatmul.f32.gmra.mxu0 %v475
    %v494 = vpop.f32.mrf.mxu0
    %v495 = vadd.f32 %v451, %v494
    %496 = vdwg.mxu0
    %497 = vmax.xlane.f32.xlu0 %v495
    %v498 = vpop.xlane.xlu0 %497
    %v499 = vsub.f32 %v495, %v498
    %v500 = vmul.f32 %v499, 1.442695
    %v501 = vpow.pop %v500
    %502 = vadd.xlane.f32.xlu0 %v501
    %v503 = vpop.xlane.xlu0 %502
    %v504 = vrcp.pop %v503
    %v505 = vmul.f32 %v503, %v504
    %v506 = vsub.f32 1.0, %v505
    %v507 = vmul.f32 %v504, %v506
    %v508 = vadd.f32 %v504, %v507
    %vm509 = vweird.f32 %v503
    %vm510 = vweird.f32 %v504
    %vm511 = vmor %vm509, %vm510
    %v512 = vsel %vm511, %v504, %v508
    %v513 = vand.u32 2147483647, %v503
    %vm514 = vcmp.eq.f32.partialorder %v513, 8.507059e+37
    %v515 = vand.u32 %v503, 2147483648
    %v516 = vor.u32 1.1754944e-38, %v515
    %v517 = vsel %vm514, %v516, %v512
    %v518 = vmul.f32 %v501, %v517
    %519 = vst [vmem:[#allocation5] sm:$0xff] %v518
    // Predicated region
    $region22: #{tpu_custom_call.1} parent=1 // pred_check
      _
    $region23: #{tpu_custom_call.1} parent=1 // pred_check_branch
      %521 = sbr.rel (0) target = $region25
    $region24: #{tpu_custom_call.1} parent=1 // pred_region
      %523 = vsyncadd [#allocation4], 0
      %s525 = sshll.u32 [#allocation5], 4
      %s526 = int_to_ptr.vmem [resolvable:$true] %s525
      %s527 = sshll.u32 %s4, 4
      %s528 = int_to_ptr.hbm [resolvable:$true] %s527
      %530 = dma.vmem_to_hbm [thread:$0]  %s526, 128, %s528, [#allocation4]
    $region25: #{tpu_custom_call.1} parent=1 // pred_fallthru
      _
    // Predicated region
    $region26: #{tpu_custom_call.1} parent=1 // pred_check
      _
    $region27: #{tpu_custom_call.1} parent=1 // pred_check_branch
      %532 = sbr.rel (0) target = $region29
    $region28: #{tpu_custom_call.1} parent=1 // pred_region
      %534 = dma.done [#allocation4], 128
    $region29: #{tpu_custom_call.1} parent=1 // pred_fallthru
      _
    %535 = vsyncpa [#allocation3], 1
    %536 = vsyncpa [#allocation4], 1

</llo_original>
